<compile_context>
chip_gen: v7x
topology: tpu7x:2x2x1
jax: 0.10.0
libtpu: 0.0.40
codegen_flags: <defaults>
</compile_context>

<pallas_src>
from functools import partial

import jax
import jax.numpy as jnp
from jax.experimental import pallas as pl
from jax.experimental.pallas import tpu as pltpu

_LANE = 1024  # lane-dense last dim (multiple of 128)


def _elu_plus_one(x):
    # elu(x) + 1 == exp(x) for x < 0, x + 1 for x >= 0.
    # Clamp the exp argument so large positive x (or OOB-read garbage in a
    # partial last block) never produces inf/NaN on the discarded branch.
    one = jnp.asarray(1.0, dtype=x.dtype)
    zero = jnp.asarray(0.0, dtype=x.dtype)
    return jnp.where(x > zero, x + one, jnp.exp(jnp.minimum(x, zero)))


def _activation_kernel(x_ref, o_ref, *, activation_fn):
    o_ref[...] = activation_fn(x_ref[...]).astype(o_ref.dtype)


def _sublane_multiple(dtype):
    # Min packed tile: (8,128) for 4-byte, (16,128) for 2-byte, (32,128) for 1-byte.
    return {4: 8, 2: 16, 1: 32}.get(jnp.dtype(dtype).itemsize, 8)


def _default_block_rows(dtype):
    """Per-generation block sizing (rows of the (rows, 1024) slab)."""
    try:
        kind = jax.devices()[0].device_kind.lower()
    except Exception:  # pragma: no cover - defensive
        kind = ""
    # v6e / v7x: 4 MiB blocks; v5e / unknown: 2 MiB (safe vs 16 MiB scoped VMEM).
    target_bytes = (4 << 20) if ("v6" in kind or "v7" in kind) else (2 << 20)
    itemsize = jnp.dtype(dtype).itemsize
    return max(_sublane_multiple(dtype), target_bytes // (_LANE * itemsize))


def activation_function_kernel(x, activation_fn=_elu_plus_one,
                               block_rows=None, donate=False):
    """Apply `activation_fn` elementwise to x via a Pallas TPU kernel."""
    orig_shape = x.shape
    n = x.size
    if n == 0:
        return x

    flat = x.reshape(-1)
    sub = _sublane_multiple(x.dtype)
    if block_rows is None:
        block_rows = _default_block_rows(x.dtype)
    block_rows = max(sub, (block_rows // sub) * sub)

    rem = n % _LANE
    main_n = n - rem
    pieces = []

    if main_n:
        rows = main_n // _LANE
        if rows <= sub:
            # Tiny input: single full-extent block (full array dim => legal
            # even if not a multiple of the sublane tile).
            blk = rows
        else:
            # >= 2 grid steps so the "parallel" axis can shard across both
            # TensorCores on v7x; each step capped at block_rows rows.
            steps = max(2, pl.cdiv(rows, block_rows))
            blk = ((pl.cdiv(rows, steps) + sub - 1) // sub) * sub
        grid = (pl.cdiv(rows, blk),)

        x2 = flat[:main_n].reshape(rows, _LANE)
        itemsize = jnp.dtype(x.dtype).itemsize
        out2 = pl.pallas_call(
            partial(_activation_kernel, activation_fn=activation_fn),
            out_shape=jax.ShapeDtypeStruct((rows, _LANE), x.dtype),
            grid=grid,
            in_specs=[pl.BlockSpec((blk, _LANE), lambda i: (i, 0))],
            out_specs=pl.BlockSpec((blk, _LANE), lambda i: (i, 0)),
            compiler_params=pltpu.CompilerParams(
                dimension_semantics=("parallel",)),
            cost_estimate=pl.CostEstimate(
                flops=3 * main_n,
                transcendentals=main_n,
                bytes_accessed=2 * main_n * itemsize),
            input_output_aliases=({0: 0} if donate else {}),
        )(x2)
        pieces.append(out2.reshape(-1))

    if rem:
        # <= 1023 trailing elements: plain JAX is far cheaper than padding the
        # whole tensor (pad + post-slice would be two extra full HBM passes).
        pieces.append(activation_fn(flat[main_n:]).astype(x.dtype))

    out = pieces[0] if len(pieces) == 1 else jnp.concatenate(pieces)
    return out.reshape(orig_shape)


if __name__ == "__main__":
    key = jax.random.PRNGKey(0)
    # (batch, seq_len, num_heads, head_size)
    batch, seq, heads, head_size = 2, 8, 4, 32
    x = jax.random.normal(key, (batch, seq, heads, head_size), dtype=jnp.float32)

    # f32: n is a multiple of 1024 -> pure kernel path, no pad / slice / concat.
    y = jax.block_until_ready(activation_function_kernel(x))
    y_ref = jax.nn.elu(x) + 1.0
    assert y.shape == x.shape and y.dtype == x.dtype
    assert jnp.allclose(y, y_ref, atol=1e-5, rtol=1e-5)

    # bf16: dtype-aware sublane tiling, looser tolerance.
    xb = x.astype(jnp.bfloat16)
    yb = jax.block_until_ready(activation_function_kernel(xb))
    yb_ref = jax.nn.elu(xb.astype(jnp.float32)) + 1.0
    assert yb.shape == xb.shape and yb.dtype == jnp.bfloat16
    assert jnp.allclose(yb.astype(jnp.float32), yb_ref, atol=2e-2, rtol=2e-2)

    # Ragged size: exercises the partial last block and the tail-in-JAX path.
    xr = jax.random.normal(key, (20, 1000), dtype=jnp.float32)
    yr = jax.block_until_ready(activation_function_kernel(xr))
    assert yr.shape == xr.shape
    assert jnp.allclose(yr, jax.nn.elu(xr) + 1.0, atol=1e-5, rtol=1e-5)

    print("KERNEL_OK")
</pallas_src>

<mosaic_0001>
module attributes {stable_mosaic.version = 11 : i64} {
  func.func @_activation_kernel(%arg0: i32, %arg1: memref<2x1024xf32, #tpu.memory_space<vmem>>, %arg2: memref<2x1024xf32, #tpu.memory_space<vmem>>) attributes {dimension_semantics = [#tpu.dimension_semantics<parallel>], iteration_bounds = array<i64: 1>, scalar_prefetch = 0 : i64, scratch_operands = 0 : i64, tpu.core_type = #tpu.core_type<tc>, window_params = [{transform_indices = @transform_0, window_bounds = array<i64: 2, 1024>}, {transform_indices = @transform_1, window_bounds = array<i64: 2, 1024>}]} {
    %c0 = arith.constant 0 : index
    %c0_0 = arith.constant 0 : index
    %0 = vector.load %arg1[%c0, %c0_0] : memref<2x1024xf32, #tpu.memory_space<vmem>>, vector<2x1024xf32>
    %cst = arith.constant 0.000000e+00 : f32
    %1 = vector.broadcast %cst : f32 to vector<2x1024xf32>
    %2 = arith.cmpf ogt, %0, %1 : vector<2x1024xf32>
    %cst_1 = arith.constant 1.000000e+00 : f32
    %3 = vector.broadcast %cst_1 : f32 to vector<2x1024xf32>
    %4 = arith.addf %0, %3 : vector<2x1024xf32>
    %cst_2 = arith.constant 0.000000e+00 : f32
    %5 = vector.broadcast %cst_2 : f32 to vector<2x1024xf32>
    %6 = arith.minimumf %0, %5 : vector<2x1024xf32>
    %7 = math.exp %6 : vector<2x1024xf32>
    %8 = arith.select %2, %4, %7 : vector<2x1024xi1>, vector<2x1024xf32>
    %c0_3 = arith.constant 0 : index
    %c0_4 = arith.constant 0 : index
    %9 = vector.load %arg2[%c0_3, %c0_4] : memref<2x1024xf32, #tpu.memory_space<vmem>>, vector<2x1024xf32>
    tpu.vector_store %arg2[%c0_3, %c0_4], %8 {strides = array<i32>} : memref<2x1024xf32, #tpu.memory_space<vmem>>, vector<2x1024xf32>,
    return
  }
  func.func @transform_0(%arg0: i32) -> (i32, i32) {
    %c0_i32 = arith.constant 0 : i32
    %c0_i32_0 = arith.constant 0 : i32
    return %arg0, %c0_i32 : i32, i32
  }
  func.func @transform_1(%arg0: i32) -> (i32, i32) {
    %c0_i32 = arith.constant 0 : i32
    %c0_i32_0 = arith.constant 0 : i32
    return %arg0, %c0_i32 : i32, i32
  }
}

</mosaic_0001>

<llo_original>
// kernel: tpu_custom_call.1
$region0: #{tpu_custom_call.1}
  #allocation0 [shape = 'u32[]', space=smem, size = 0x4, offset = 0x4, fixed_abs, tag = 'smem constant byte address 0x4 - core index']
  #allocation1 [shape = 'u32[144,128]{1,0:T(1,128)}', space=vmem, size = 0x12000, scoped, tag = 'internal scratch']
  %s0 = inlined_call_operand.hbm [shape: f32[2,1024], index: 0, kind: input, shape index: {}]
  %s1 = inlined_call_operand.hbm [shape: f32[2,1024], index: 1, kind: output, shape index: {}]
  %s2 = sld [smem:[#allocation0]]
  $region18: #{tpu_custom_call.1} parent=0
    _
  %s4 = ssub.s32 1, %s2
  %s5 = scalar_select 0, %s4, %s2
  $region1: #{tpu_custom_call.1} parent=0
    #allocation2 [shape = 'u8[8192]{0}', space=vmem, size = 0x2000, scoped, tag = 'input window, operand 0, single buffered']
    #allocation3 [shape = 's32[1]{0}', space=sflag, size = 0x4, scoped, tag = 'scoped memory for tpu_custom_call.1']
    #allocation4 [shape = 's32[1]{0}', space=sflag, size = 0x4, scoped, tag = 'scoped memory for tpu_custom_call.1']
    #allocation5 [shape = 'u8[8192]{0}', space=vmem, size = 0x2000, scoped, tag = 'output window, operand 0, single buffered']
    %6 = vsyncpa [#allocation3], 0
    %7 = vsyncpa [#allocation4], 0
    // Predicated region
    $region2: #{tpu_custom_call.1} parent=1 // pred_check
      _
    $region3: #{tpu_custom_call.1} parent=1 // pred_check_branch
      %9 = sbr.rel (0) target = $region5
    $region4: #{tpu_custom_call.1} parent=1 // pred_region
      %s11 = ssub.s32 256, 256
      %12 = vsyncadd [#allocation3], %s11
      %s14 = sshll.u32 [#allocation2], 4
      %s15 = int_to_ptr.vmem [resolvable:$true] %s14
      %17 = dma.hbm_to_vmem [thread:$0]  %s0, 256, %s15, [#allocation3]
    $region5: #{tpu_custom_call.1} parent=1 // pred_fallthru
      _
    // Predicated region
    $region6: #{tpu_custom_call.1} parent=1 // pred_check
      _
    $region7: #{tpu_custom_call.1} parent=1 // pred_check_branch
      %19 = sbr.rel (0) target = $region9
    $region8: #{tpu_custom_call.1} parent=1 // pred_region
      %20 = dma.done [#allocation3], 256
    $region9: #{tpu_custom_call.1} parent=1 // pred_fallthru
      _
    %v21 = vld [vmem:[#allocation2] sm:$0xff]
    %v22 = vld [vmem:[#allocation2 + $0x8] sm:$0xff]
    %vm23 = vcmp.gt.f32.partialorder %v21, 0.0
    %vm24 = vcmp.gt.f32.partialorder %v22, 0.0
    %v25 = vadd.f32 %v21, 1.0
    %v26 = vadd.f32 %v22, 1.0
    %v27 = vmin.f32 %v21, 0.0
    %v28 = vmin.f32 %v22, 0.0
    %v29 = vmul.f32 %v27, 1.442695
    %v30 = vpow.pop %v29
    %v31 = vmul.f32 %v28, 1.442695
    %v32 = vpow.pop %v31
    %v33 = vsel %vm23, %v25, %v30
    %v34 = vsel %vm24, %v26, %v32
    %35 = vst [vmem:[#allocation5] sm:$0xff] %v33
    %36 = vst [vmem:[#allocation5 + $0x8] sm:$0xff] %v34
    // Predicated region
    $region10: #{tpu_custom_call.1} parent=1 // pred_check
      _
    $region11: #{tpu_custom_call.1} parent=1 // pred_check_branch
      %38 = sbr.rel (0) target = $region13
    $region12: #{tpu_custom_call.1} parent=1 // pred_region
      %s40 = ssub.s32 256, 256
      %41 = vsyncadd [#allocation4], %s40
      %s43 = sshll.u32 [#allocation5], 4
      %s44 = int_to_ptr.vmem [resolvable:$true] %s43
      %46 = dma.vmem_to_hbm [thread:$0]  %s44, 256, %s1, [#allocation4]
    $region13: #{tpu_custom_call.1} parent=1 // pred_fallthru
      _
    // Predicated region
    $region14: #{tpu_custom_call.1} parent=1 // pred_check
      _
    $region15: #{tpu_custom_call.1} parent=1 // pred_check_branch
      %48 = sbr.rel (0) target = $region17
    $region16: #{tpu_custom_call.1} parent=1 // pred_region
      %49 = dma.done [#allocation4], 256
    $region17: #{tpu_custom_call.1} parent=1 // pred_fallthru
      _
    %50 = vsyncpa [#allocation3], 1
    %51 = vsyncpa [#allocation4], 1

</llo_original>
